<compile_context>
chip_gen: v5e
topology: v5e:2x2
jax: 0.10.0
libtpu: 0.0.40
codegen_flags: <defaults>
</compile_context>

<pallas_src>
import functools

import jax
import jax.numpy as jnp
from jax.experimental import pallas as pl
from jax.experimental.pallas import tpu as pltpu


def fused_bigram_kernel(ctx_ref, tok_ref, pos_ref, wqkv_ref, wlm_ref, blm_ref,
                        o_ref, *, bt, T, E, Vtab):
    # ctx_ref : (bt, T, 1)        int32  token ids for this batch tile
    # tok_ref : (Vtab, E)         bf16   token-embedding table (rows 0-padded to 128)
    # pos_ref : (block_size, E)   bf16   positional-embedding table
    # wqkv_ref: (3, E, E)         bf16   [q*scale, k, v] projection weights, (in, out)
    # wlm_ref : (E, Vp)           bf16   lm_head weight (transposed, vocab padded)
    # blm_ref : (1, Vp)           f32    lm_head bias (pad columns = -1e30)
    # o_ref   : (bt, T, Vp)       f32    padded logits (lane-dense last dim)

    # ---- token embedding gather: exact one-hot matmul against the resident table.
    ids = ctx_ref[...]                                               # (bt, T, 1)
    vocab = jax.lax.broadcasted_iota(jnp.int32, (bt, T, Vtab), 2)
    onehot = (ids == vocab).astype(tok_ref.dtype)                    # (bt, T, Vtab)
    tok = jnp.dot(onehot.reshape(bt * T, Vtab), tok_ref[...],
                  preferred_element_type=jnp.float32)                # (bt*T, E) f32

    # ---- + positional embeddings (elementwise in f32).
    x = tok.reshape(bt, T, E) + pos_ref[0:T, :].astype(jnp.float32)[None, :, :]

    # ---- q/k/v projections; q weights already carry the 1/sqrt(E) scale.
    x2d = x.reshape(bt * T, E).astype(wqkv_ref.dtype)                # bf16 MXU input
    q = jnp.dot(x2d, wqkv_ref[0], preferred_element_type=jnp.float32).reshape(bt, T, E)
    k = jnp.dot(x2d, wqkv_ref[1], preferred_element_type=jnp.float32).reshape(bt, T, E)
    v = jnp.dot(x2d, wqkv_ref[2], preferred_element_type=jnp.float32).reshape(bt, T, E)

    # Attention scores: contract last dims directly (no transposed copy of k).
    wei = jnp.einsum('bqd,bkd->bqk', q, k,
                     preferred_element_type=jnp.float32)             # (bt, T, T)

    # Causal mask (tril). Large finite negative instead of -inf: NaN-safe.
    row = jax.lax.broadcasted_iota(jnp.int32, (T, T), 0)
    col = jax.lax.broadcasted_iota(jnp.int32, (T, T), 1)
    wei = jnp.where((col <= row)[None, :, :], wei, -1e30)

    # Softmax along last axis; normalization via EUP approximate reciprocal.
    m = jnp.max(wei, axis=-1, keepdims=True)
    e = jnp.exp(wei - m)
    s = jnp.sum(e, axis=-1, keepdims=True)
    p = e * pl.reciprocal(s, approx=True)

    out = jnp.einsum('bqk,bkd->bqd', p, v,
                     preferred_element_type=jnp.float32)             # (bt, T, E)

    # ---- lm_head: row-packed, lane-dense (multiple-of-128) output store.
    out2d = out.reshape(bt * T, E).astype(wlm_ref.dtype)
    logits = jnp.dot(out2d, wlm_ref[...],
                     preferred_element_type=jnp.float32) + blm_ref[...]
    o_ref[...] = logits.reshape(bt, T, -1)


def prepack_params(params):
    """One-time packing of PyTorch-layout params into kernel-ready arrays.

    Everything that used to run per forward call (transposes, concat, vocab
    padding, dtype casts) happens here exactly once.  MXU operands are stored
    as bf16 (accumulation stays f32 inside the kernel); biases stay f32.
    """
    tok = params["token_embedding"]
    pos = params["position_embedding"]
    V, E = tok.shape
    block_size = pos.shape[0]
    Vp = ((V + 127) // 128) * 128     # lane-dense lm_head output width
    Vtab = Vp                         # padded one-hot gather contraction dim

    # NOTE: scale uses channels**-0.5 == E**-0.5; head_size is tied to the
    # embedding dim in this module, so folding the scale into Q is exact.
    scale = float(E) ** (-0.5)

    # nn.Linear stores (out, in) -> transpose to (in, out); stack on a leading
    # axis so q/k/v are selected by a (free) leading-axis index in-kernel.
    wqkv = jnp.stack(
        [params["q_w"].T * scale, params["k_w"].T, params["v_w"].T],
        axis=0).astype(jnp.bfloat16)                                  # (3, E, E)

    tok_table = jnp.zeros((Vtab, E), jnp.bfloat16).at[:V].set(
        tok.astype(jnp.bfloat16))                                     # (Vtab, E)
    pos_table = pos.astype(jnp.bfloat16)                              # (block_size, E)

    wlm = jnp.zeros((E, Vp), jnp.bfloat16).at[:, :V].set(
        params["lm_head_w"].T.astype(jnp.bfloat16))                   # (E, Vp)
    # Padded vocab columns get bias -1e30 so they vanish under any downstream
    # softmax even if a caller keeps the padded logits width.
    blm = jnp.full((1, Vp), -1e30, jnp.float32).at[:, :V].set(
        params["lm_head_b"].astype(jnp.float32)[None, :])             # (1, Vp)

    return {
        "tok_table": tok_table, "pos_table": pos_table,
        "wqkv": wqkv, "wlm": wlm, "blm": blm,
        "V": V, "E": E, "Vp": Vp, "Vtab": Vtab, "block_size": block_size,
    }


def bigram_forward(context, packed, *, slice_vocab=True):
    """Forward pass of BigramLanguageModelMKII with targets=None.

    context: (B, T) integer token ids.  Returns (logits, None) — loss is None
    when no targets are provided, matching the PyTorch module.
    """
    # TODO(synk): targets path (cross-entropy loss) not implemented; this mirrors
    # the targets=None branch of the module.  (Head's nn.Dropout is never applied
    # in its forward, so there is nothing to port for it.)
    B, T = context.shape
    E, V, Vp, Vtab = packed["E"], packed["V"], packed["Vp"], packed["Vtab"]
    block_size = packed["block_size"]
    assert T <= block_size

    # Batch tiling: ~512 packed rows per grid step.  bt lives on the 3rd-from-
    # last dim of every batch-tiled block, so it has no (8,128) constraint.
    bt = min(B, max(1, 512 // T))
    nb = pl.cdiv(B, bt)
    B_pad = nb * bt

    ctx = context.astype(jnp.int32)[:, :, None]                       # (B, T, 1)
    if B_pad != B:
        # Ragged last tile: pad with token id 0 (valid id); rows sliced off below.
        ctx = jnp.pad(ctx, ((0, B_pad - B), (0, 0), (0, 0)))

    kernel = functools.partial(fused_bigram_kernel, bt=bt, T=T, E=E, Vtab=Vtab)

    logits_padded = pl.pallas_call(
        kernel,
        out_shape=jax.ShapeDtypeStruct((B_pad, T, Vp), jnp.float32),
        grid_spec=pltpu.PrefetchScalarGridSpec(
            num_scalar_prefetch=0,
            grid=(nb,),
            in_specs=[
                pl.BlockSpec((bt, T, 1), lambda b: (b, 0, 0)),        # context ids
                pl.BlockSpec((Vtab, E), lambda b: (0, 0)),            # token table
                pl.BlockSpec((block_size, E), lambda b: (0, 0)),      # position table
                pl.BlockSpec((3, E, E), lambda b: (0, 0, 0)),         # wqkv (scaled q)
                pl.BlockSpec((E, Vp), lambda b: (0, 0)),              # lm_head weight
                pl.BlockSpec((1, Vp), lambda b: (0, 0)),              # lm_head bias
            ],
            out_specs=pl.BlockSpec((bt, T, Vp), lambda b: (b, 0, 0)),
        ),
        # With nb >= 2 (non-toy batch) the parallel axis shards across v7x's
        # two TensorCores.  At realistic E/V, add a grid axis over Vp tiles
        # and/or single-buffer the constant-index weight blocks to respect
        # v7x's 64 MiB VMEM.
        compiler_params=pltpu.CompilerParams(
            dimension_semantics=("parallel",)),
    )(ctx, packed["tok_table"], packed["pos_table"], packed["wqkv"],
      packed["wlm"], packed["blm"])

    logits = logits_padded[:B] if B_pad != B else logits_padded
    if slice_vocab:
        # Module-parity (B, T, vocab).  Callers that keep the padded width are
        # still safe downstream because padded columns are -1e30.
        logits = logits[..., :V]
    return logits, None


def init_params(key, vocab_size, embedding_dimention, block_size):
    ks = jax.random.split(key, 6)
    E = embedding_dimention
    std = 1.0 / (E ** 0.5)
    return {
        "token_embedding": jax.random.normal(ks[0], (vocab_size, E), jnp.float32),
        "position_embedding": jax.random.normal(ks[1], (block_size, E), jnp.float32),
        # nn.Linear weights stored PyTorch-style as (out_features, in_features)
        "k_w": jax.random.uniform(ks[2], (E, E), jnp.float32, -std, std),
        "q_w": jax.random.uniform(ks[3], (E, E), jnp.float32, -std, std),
        "v_w": jax.random.uniform(ks[4], (E, E), jnp.float32, -std, std),
        "lm_head_w": jax.random.uniform(ks[5], (vocab_size, E), jnp.float32, -std, std),
        "lm_head_b": jnp.zeros((vocab_size,), jnp.float32),
    }


def reference_forward(context, params):
    """Plain-JAX f32 reference mirroring the PyTorch module (targets=None)."""
    B, T = context.shape
    E = params["token_embedding"].shape[1]
    x = params["token_embedding"][context] + params["position_embedding"][:T][None]
    k = x @ params["k_w"].T
    q = x @ params["q_w"].T
    wei = (q @ jnp.swapaxes(k, -2, -1)) * (E ** -0.5)
    row = jnp.arange(T)[:, None]
    col = jnp.arange(T)[None, :]
    wei = jnp.where(col <= row, wei, -jnp.inf)
    wei = jax.nn.softmax(wei, axis=-1)
    v = x @ params["v_w"].T
    out = wei @ v
    return out @ params["lm_head_w"].T + params["lm_head_b"]


if __name__ == "__main__":
    # Small, module-consistent shapes.
    vocab_size = 65
    embedding_dimention = 32
    block_size = 8

    key = jax.random.PRNGKey(0)
    pkey, ckey = jax.random.split(key)
    params = init_params(pkey, vocab_size, embedding_dimention, block_size)
    packed = prepack_params(params)          # one-time packing, not per call

    B, T = 2, block_size
    context = jax.random.randint(ckey, (B, T), 0, vocab_size, dtype=jnp.int32)

    logits, loss = bigram_forward(context, packed)
    logits = jax.block_until_ready(logits)

    ref = reference_forward(context, params)
    assert logits.shape == (B, T, vocab_size)
    assert loss is None
    # Relaxed tolerance: tables/weights are fed to the MXU in bf16 and the
    # softmax denominator uses the EUP approximate reciprocal.
    assert jnp.allclose(logits, ref, atol=5e-2, rtol=5e-2), \
        float(jnp.max(jnp.abs(logits - ref)))

    print("KERNEL_OK")
</pallas_src>

<mosaic_0001>
module attributes {stable_mosaic.version = 11 : i64} {
  func.func @fused_bigram_kernel(%arg0: i32, %arg1: memref<2x8x1xi32, #tpu.memory_space<vmem>>, %arg2: memref<128x32xbf16, #tpu.memory_space<vmem>>, %arg3: memref<8x32xbf16, #tpu.memory_space<vmem>>, %arg4: memref<3x32x32xbf16, #tpu.memory_space<vmem>>, %arg5: memref<32x128xbf16, #tpu.memory_space<vmem>>, %arg6: memref<1x128xf32, #tpu.memory_space<vmem>>, %arg7: memref<2x8x128xf32, #tpu.memory_space<vmem>>) attributes {dimension_semantics = [#tpu.dimension_semantics<parallel>], iteration_bounds = array<i64: 1>, scalar_prefetch = 0 : i64, scratch_operands = 0 : i64, tpu.core_type = #tpu.core_type<tc>, window_params = [{transform_indices = @transform_0, window_bounds = array<i64: 2, 8, 1>}, {pipeline_mode = #tpu.pipeline_mode<synchronous>, transform_indices = @transform_1, window_bounds = array<i64: 128, 32>}, {pipeline_mode = #tpu.pipeline_mode<synchronous>, transform_indices = @transform_2, window_bounds = array<i64: 8, 32>}, {pipeline_mode = #tpu.pipeline_mode<synchronous>, transform_indices = @transform_3, window_bounds = array<i64: 3, 32, 32>}, {pipeline_mode = #tpu.pipeline_mode<synchronous>, transform_indices = @transform_4, window_bounds = array<i64: 32, 128>}, {pipeline_mode = #tpu.pipeline_mode<synchronous>, transform_indices = @transform_5, window_bounds = array<i64: 1, 128>}, {transform_indices = @transform_6, window_bounds = array<i64: 2, 8, 128>}]} {
    %c0 = arith.constant 0 : index
    %c0_0 = arith.constant 0 : index
    %c0_1 = arith.constant 0 : index
    %0 = vector.load %arg1[%c0, %c0_0, %c0_1] : memref<2x8x1xi32, #tpu.memory_space<vmem>>, vector<2x8x1xi32>
    %1 = tpu.iota {dimensions = array<i32: 2>} : vector<2x8x128xi32>
    %2 = vector.broadcast %0 : vector<2x8x1xi32> to vector<2x8x128xi32>
    %3 = arith.cmpi eq, %2, %1 : vector<2x8x128xi32>
    %4 = arith.extui %3 : vector<2x8x128xi1> to vector<2x8x128xi32>
    %5 = arith.sitofp %4 : vector<2x8x128xi32> to vector<2x8x128xf32>
    %6 = arith.truncf %5 : vector<2x8x128xf32> to vector<2x8x128xbf16>
    %7 = vector.shape_cast %6 : vector<2x8x128xbf16> to vector<16x128xbf16>
    %c0_2 = arith.constant 0 : index
    %c0_3 = arith.constant 0 : index
    %8 = vector.load %arg2[%c0_2, %c0_3] : memref<128x32xbf16, #tpu.memory_space<vmem>>, vector<128x32xbf16>
    %cst = arith.constant dense<0.000000e+00> : vector<16x32xf32>
    %9 = tpu.matmul %7, %8, %cst {dimension_numbers = #tpu.dot_dimension_numbers<[1], [0], [0], [1], [0, 0, 1, 1], [], []>} : vector<16x128xbf16>, vector<128x32xbf16>, vector<16x32xf32> -> vector<16x32xf32>
    %10 = vector.shape_cast %9 : vector<16x32xf32> to vector<2x8x32xf32>
    %c0_4 = arith.constant 0 : index
    %c0_5 = arith.constant 0 : index
    %11 = vector.load %arg3[%c0_4, %c0_5] : memref<8x32xbf16, #tpu.memory_space<vmem>>, vector<8x32xbf16>
    %12 = arith.extf %11 : vector<8x32xbf16> to vector<8x32xf32>
    %13 = vector.shape_cast %12 : vector<8x32xf32> to vector<1x8x32xf32>
    %14 = vector.broadcast %13 : vector<1x8x32xf32> to vector<2x8x32xf32>
    %15 = arith.addf %10, %14 : vector<2x8x32xf32>
    %16 = vector.shape_cast %15 : vector<2x8x32xf32> to vector<16x32xf32>
    %17 = arith.truncf %16 : vector<16x32xf32> to vector<16x32xbf16>
    %c0_6 = arith.constant 0 : index
    %c0_7 = arith.constant 0 : index
    %c0_8 = arith.constant 0 : index
    %18 = vector.load %arg4[%c0_6, %c0_7, %c0_8] : memref<3x32x32xbf16, #tpu.memory_space<vmem>>, vector<1x32x32xbf16>
    %19 = vector.shape_cast %18 : vector<1x32x32xbf16> to vector<32x32xbf16>
    %cst_9 = arith.constant dense<0.000000e+00> : vector<16x32xf32>
    %20 = tpu.matmul %17, %19, %cst_9 {dimension_numbers = #tpu.dot_dimension_numbers<[1], [0], [0], [1], [0, 0, 1, 1], [], []>} : vector<16x32xbf16>, vector<32x32xbf16>, vector<16x32xf32> -> vector<16x32xf32>
    %21 = vector.shape_cast %20 : vector<16x32xf32> to vector<2x8x32xf32>
    %c1 = arith.constant 1 : index
    %c0_10 = arith.constant 0 : index
    %c0_11 = arith.constant 0 : index
    %22 = vector.load %arg4[%c1, %c0_10, %c0_11] : memref<3x32x32xbf16, #tpu.memory_space<vmem>>, vector<1x32x32xbf16>
    %23 = vector.shape_cast %22 : vector<1x32x32xbf16> to vector<32x32xbf16>
    %cst_12 = arith.constant dense<0.000000e+00> : vector<16x32xf32>
    %24 = tpu.matmul %17, %23, %cst_12 {dimension_numbers = #tpu.dot_dimension_numbers<[1], [0], [0], [1], [0, 0, 1, 1], [], []>} : vector<16x32xbf16>, vector<32x32xbf16>, vector<16x32xf32> -> vector<16x32xf32>
    %25 = vector.shape_cast %24 : vector<16x32xf32> to vector<2x8x32xf32>
    %c2 = arith.constant 2 : index
    %c0_13 = arith.constant 0 : index
    %c0_14 = arith.constant 0 : index
    %26 = vector.load %arg4[%c2, %c0_13, %c0_14] : memref<3x32x32xbf16, #tpu.memory_space<vmem>>, vector<1x32x32xbf16>
    %27 = vector.shape_cast %26 : vector<1x32x32xbf16> to vector<32x32xbf16>
    %cst_15 = arith.constant dense<0.000000e+00> : vector<16x32xf32>
    %28 = tpu.matmul %17, %27, %cst_15 {dimension_numbers = #tpu.dot_dimension_numbers<[1], [0], [0], [1], [0, 0, 1, 1], [], []>} : vector<16x32xbf16>, vector<32x32xbf16>, vector<16x32xf32> -> vector<16x32xf32>
    %29 = vector.shape_cast %28 : vector<16x32xf32> to vector<2x8x32xf32>
    "tpu.trace_start"() <{level = 10 : i32, message = "bqd,bkd->bqk"}> : () -> ()
    %cst_16 = arith.constant dense<0.000000e+00> : vector<2x8x8xf32>
    %30 = tpu.matmul %21, %25, %cst_16 {dimension_numbers = #tpu.dot_dimension_numbers<[2], [2], [1], [1], [0, 0, 0, 1, 1, 1], [0], [0]>} : vector<2x8x32xf32>, vector<2x8x32xf32>, vector<2x8x8xf32> -> vector<2x8x8xf32>
    "tpu.trace_stop"() : () -> ()
    %31 = tpu.iota {dimensions = array<i32: 0>} : vector<8x8xi32>
    %32 = tpu.iota {dimensions = array<i32: 1>} : vector<8x8xi32>
    %33 = arith.cmpi sle, %32, %31 : vector<8x8xi32>
    %34 = vector.shape_cast %33 : vector<8x8xi1> to vector<1x8x8xi1>
    %cst_17 = arith.constant -1.000000e+30 : f32
    %35 = vector.shape_cast %34 : vector<1x8x8xi1> to vector<1x8x8xi1>
    %36 = vector.broadcast %35 : vector<1x8x8xi1> to vector<2x8x8xi1>
    %37 = vector.broadcast %cst_17 : f32 to vector<2x8x8xf32>
    %38 = arith.select %36, %30, %37 : vector<2x8x8xi1>, vector<2x8x8xf32>
    %cst_18 = arith.constant dense<0xFF800000> : vector<2x8xf32>
    %39 = vector.multi_reduction <maximumf>, %38, %cst_18 [2] : vector<2x8x8xf32> to vector<2x8xf32>
    %40 = vector.shape_cast %39 : vector<2x8xf32> to vector<2x8x1xf32>
    %41 = vector.broadcast %40 : vector<2x8x1xf32> to vector<2x8x8xf32>
    %42 = arith.subf %38, %41 : vector<2x8x8xf32>
    %43 = math.exp %42 : vector<2x8x8xf32>
    %cst_19 = arith.constant dense<0.000000e+00> : vector<2x8xf32>
    %44 = vector.multi_reduction <add>, %43, %cst_19 [2] : vector<2x8x8xf32> to vector<2x8xf32>
    %45 = vector.shape_cast %44 : vector<2x8xf32> to vector<2x8x1xf32>
    %46 = tpu.reciprocal %45 {approx = true} : vector<2x8x1xf32> -> vector<2x8x1xf32>
    %47 = vector.broadcast %46 : vector<2x8x1xf32> to vector<2x8x8xf32>
    %48 = arith.mulf %43, %47 : vector<2x8x8xf32>
    "tpu.trace_start"() <{level = 10 : i32, message = "bqk,bkd->bqd"}> : () -> ()
    %cst_20 = arith.constant dense<0.000000e+00> : vector<2x8x32xf32>
    %49 = tpu.matmul %48, %29, %cst_20 {dimension_numbers = #tpu.dot_dimension_numbers<[2], [1], [1], [2], [0, 0, 0, 1, 1, 2], [0], [0]>} : vector<2x8x8xf32>, vector<2x8x32xf32>, vector<2x8x32xf32> -> vector<2x8x32xf32>
    "tpu.trace_stop"() : () -> ()
    %50 = vector.shape_cast %49 : vector<2x8x32xf32> to vector<16x32xf32>
    %51 = arith.truncf %50 : vector<16x32xf32> to vector<16x32xbf16>
    %c0_21 = arith.constant 0 : index
    %c0_22 = arith.constant 0 : index
    %52 = vector.load %arg5[%c0_21, %c0_22] : memref<32x128xbf16, #tpu.memory_space<vmem>>, vector<32x128xbf16>
    %cst_23 = arith.constant dense<0.000000e+00> : vector<16x128xf32>
    %53 = tpu.matmul %51, %52, %cst_23 {dimension_numbers = #tpu.dot_dimension_numbers<[1], [0], [0], [1], [0, 0, 1, 1], [], []>} : vector<16x32xbf16>, vector<32x128xbf16>, vector<16x128xf32> -> vector<16x128xf32>
    %c0_24 = arith.constant 0 : index
    %c0_25 = arith.constant 0 : index
    %54 = vector.load %arg6[%c0_24, %c0_25] : memref<1x128xf32, #tpu.memory_space<vmem>>, vector<1x128xf32>
    %55 = vector.broadcast %54 : vector<1x128xf32> to vector<16x128xf32>
    %56 = arith.addf %53, %55 : vector<16x128xf32>
    %57 = vector.shape_cast %56 : vector<16x128xf32> to vector<2x8x128xf32>
    %c0_26 = arith.constant 0 : index
    %c0_27 = arith.constant 0 : index
    %c0_28 = arith.constant 0 : index
    %58 = vector.load %arg7[%c0_26, %c0_27, %c0_28] : memref<2x8x128xf32, #tpu.memory_space<vmem>>, vector<2x8x128xf32>
    tpu.vector_store %arg7[%c0_26, %c0_27, %c0_28], %57 {strides = array<i32>} : memref<2x8x128xf32, #tpu.memory_space<vmem>>, vector<2x8x128xf32>,
    return
  }
  func.func @transform_0(%arg0: i32) -> (i32, i32, i32) {
    %c0_i32 = arith.constant 0 : i32
    %c0_i32_0 = arith.constant 0 : i32
    %c0_i32_1 = arith.constant 0 : i32
    return %arg0, %c0_i32, %c0_i32_0 : i32, i32, i32
  }
  func.func @transform_1(%arg0: i32) -> (i32, i32) {
    %c0_i32 = arith.constant 0 : i32
    %c0_i32_0 = arith.constant 0 : i32
    %c0_i32_1 = arith.constant 0 : i32
    return %c0_i32, %c0_i32_0 : i32, i32
  }
  func.func @transform_2(%arg0: i32) -> (i32, i32) {
    %c0_i32 = arith.constant 0 : i32
    %c0_i32_0 = arith.constant 0 : i32
    %c0_i32_1 = arith.constant 0 : i32
    return %c0_i32, %c0_i32_0 : i32, i32
  }
  func.func @transform_3(%arg0: i32) -> (i32, i32, i32) {
    %c0_i32 = arith.constant 0 : i32
    %c0_i32_0 = arith.constant 0 : i32
    %c0_i32_1 = arith.constant 0 : i32
    %c0_i32_2 = arith.constant 0 : i32
    return %c0_i32, %c0_i32_0, %c0_i32_1 : i32, i32, i32
  }
  func.func @transform_4(%arg0: i32) -> (i32, i32) {
    %c0_i32 = arith.constant 0 : i32
    %c0_i32_0 = arith.constant 0 : i32
    %c0_i32_1 = arith.constant 0 : i32
    return %c0_i32, %c0_i32_0 : i32, i32
  }
  func.func @transform_5(%arg0: i32) -> (i32, i32) {
    %c0_i32 = arith.constant 0 : i32
    %c0_i32_0 = arith.constant 0 : i32
    %c0_i32_1 = arith.constant 0 : i32
    return %c0_i32, %c0_i32_0 : i32, i32
  }
  func.func @transform_6(%arg0: i32) -> (i32, i32, i32) {
    %c0_i32 = arith.constant 0 : i32
    %c0_i32_0 = arith.constant 0 : i32
    %c0_i32_1 = arith.constant 0 : i32
    return %arg0, %c0_i32, %c0_i32_0 : i32, i32, i32
  }
}

</mosaic_0001>

<llo_original>
// kernel: tpu_custom_call.1
$region0: #{tpu_custom_call.1}
  #allocation0 [shape = 'u32[]', space=smem, size = 0x4, offset = 0x4, fixed_abs, tag = 'smem constant byte address 0x4 - core index']
  #allocation1 [shape = 'u32[72,128]{1,0:T(1,128)}', space=vmem, size = 0x9000, scoped, tag = 'internal scratch']
  %s0 = inlined_call_operand.vmem [shape: s32[2,8,1], index: 0, kind: input, shape index: {}]
  %s1 = inlined_call_operand.vmem [shape: bf16[128,32], index: 1, kind: input, shape index: {}]
  %s2 = inlined_call_operand.vmem [shape: bf16[8,32], index: 2, kind: input, shape index: {}]
  %s3 = inlined_call_operand.vmem [shape: bf16[3,32,32], index: 3, kind: input, shape index: {}]
  %s4 = inlined_call_operand.vmem [shape: bf16[32,128], index: 4, kind: input, shape index: {}]
  %s5 = inlined_call_operand.vmem [shape: f32[1,128], index: 5, kind: input, shape index: {}]
  %s6 = inlined_call_operand.hbm [shape: f32[2,8,128], index: 6, kind: output, shape index: {}]
  %s7 = sld [smem:[#allocation0]]
  $region34: #{tpu_custom_call.1} parent=0
    _
  %s9 = ssub.s32 1, %s7
  %s10 = scalar_select 0, %s9, %s7
  $region1: #{tpu_custom_call.1} parent=0
    #allocation2 [shape = 'u8[8192]{0}', space=vmem, size = 0x2000, scoped, tag = 'output window, operand 0, single buffered']
    #allocation3 [shape = 's32[1]{0}', space=sflag, size = 0x4, scoped, tag = 'scoped memory for tpu_custom_call.1']
    %11 = vsyncpa [#allocation3], 0
    // Predicated region
    $region2: #{tpu_custom_call.1} parent=1 // pred_check
      _
    $region3: #{tpu_custom_call.1} parent=1 // pred_check_branch
      %13 = sbr.rel (0) target = $region5
    $region4: #{tpu_custom_call.1} parent=1 // pred_region
      _
    $region5: #{tpu_custom_call.1} parent=1 // pred_fallthru
      _
    // Predicated region
    $region6: #{tpu_custom_call.1} parent=1 // pred_check
      _
    $region7: #{tpu_custom_call.1} parent=1 // pred_check_branch
      %15 = sbr.rel (0) target = $region9
    $region8: #{tpu_custom_call.1} parent=1 // pred_region
      _
    $region9: #{tpu_custom_call.1} parent=1 // pred_fallthru
      _
    // Predicated region
    $region10: #{tpu_custom_call.1} parent=1 // pred_check
      _
    $region11: #{tpu_custom_call.1} parent=1 // pred_check_branch
      %17 = sbr.rel (0) target = $region13
    $region12: #{tpu_custom_call.1} parent=1 // pred_region
      _
    $region13: #{tpu_custom_call.1} parent=1 // pred_fallthru
      _
    // Predicated region
    $region14: #{tpu_custom_call.1} parent=1 // pred_check
      _
    $region15: #{tpu_custom_call.1} parent=1 // pred_check_branch
      %19 = sbr.rel (0) target = $region17
    $region16: #{tpu_custom_call.1} parent=1 // pred_region
      _
    $region17: #{tpu_custom_call.1} parent=1 // pred_fallthru
      _
    // Predicated region
    $region18: #{tpu_custom_call.1} parent=1 // pred_check
      _
    $region19: #{tpu_custom_call.1} parent=1 // pred_check_branch
      %21 = sbr.rel (0) target = $region21
    $region20: #{tpu_custom_call.1} parent=1 // pred_region
      _
    $region21: #{tpu_custom_call.1} parent=1 // pred_fallthru
      _
    // Predicated region
    $region22: #{tpu_custom_call.1} parent=1 // pred_check
      _
    $region23: #{tpu_custom_call.1} parent=1 // pred_check_branch
      %23 = sbr.rel (0) target = $region25
    $region24: #{tpu_custom_call.1} parent=1 // pred_region
      _
    $region25: #{tpu_custom_call.1} parent=1 // pred_fallthru
      _
    %v25 = vld [vmem:[%s0] sm:$0xff]
    %v26 = vld [vmem:[%s0 + $0x8] sm:$0xff]
    %v27 = vlaneseq
    %v28 = vand.u32 %v27, 127
    %29 = vset.pattern.permute.xlu0 0
    %30 = vperm.xlu0 %29, %v25
    %v31 = vpop.permute.xlu0 %30
    %32 = vset.pattern.permute.xlu0 0
    %33 = vperm.xlu0 %32, %v26
    %v34 = vpop.permute.xlu0 %33
    %vm35 = vcmp.eq.s32.totalorder %v31, %v28
    %vm36 = vcmp.eq.s32.totalorder %v34, %v28
    %v37 = vsel %vm35, 1, 0
    %v38 = vsel %vm36, 1, 0
    %v39 = vcvt.s32.f32 %v37
    %v40 = vcvt.s32.f32 %v38
    %v41 = vpack.c.bf16 %v39, %v39
    %v42 = vpack.c.bf16 %v40, %v40
    %v43 = vld [vmem:[%s1] sm:$0xf]
    %v44 = vld [vmem:[%s1 + $0x4] sm:$0xf]
    %v45 = vld [vmem:[%s1 + $0x8] sm:$0xf]
    %v46 = vld [vmem:[%s1 + $0xc] sm:$0xf]
    %v47 = vld [vmem:[%s1 + $0x10] sm:$0xf]
    %v48 = vld [vmem:[%s1 + $0x14] sm:$0xf]
    %v49 = vld [vmem:[%s1 + $0x18] sm:$0xf]
    %v50 = vld [vmem:[%s1 + $0x1c] sm:$0xf]
    %v51 = vld [vmem:[%s1 + $0x20] sm:$0xf]
    %v52 = vld [vmem:[%s1 + $0x24] sm:$0xf]
    %v53 = vld [vmem:[%s1 + $0x28] sm:$0xf]
    %v54 = vld [vmem:[%s1 + $0x2c] sm:$0xf]
    %v55 = vld [vmem:[%s1 + $0x30] sm:$0xf]
    %v56 = vld [vmem:[%s1 + $0x34] sm:$0xf]
    %v57 = vld [vmem:[%s1 + $0x38] sm:$0xf]
    %v58 = vld [vmem:[%s1 + $0x3c] sm:$0xf]
    %v61 = vunpack.c.l.b16 %v41
    %v62 = vunpack.c.l.b16 %v42
    %v63 = vpack.c.b16 %v62, %v61
    %v81 = vunpack.c.l.b16 %v43
    %v82 = vunpack.c.l.b16 %v44
    %v83 = vunpack.c.l.b16 %v45
    %v84 = vunpack.c.l.b16 %v46
    %v85 = vunpack.c.l.b16 %v47
    %v86 = vunpack.c.l.b16 %v48
    %v87 = vunpack.c.l.b16 %v49
    %v88 = vunpack.c.l.b16 %v50
    %v89 = vunpack.c.l.b16 %v51
    %v90 = vunpack.c.l.b16 %v52
    %v91 = vunpack.c.l.b16 %v53
    %v92 = vunpack.c.l.b16 %v54
    %v93 = vunpack.c.l.b16 %v55
    %v94 = vunpack.c.l.b16 %v56
    %v95 = vunpack.c.l.b16 %v57
    %v96 = vunpack.c.l.b16 %v58
    %v97 = vpack.c.b16 %v82, %v81
    %v98 = vpack.c.b16 %v84, %v83
    %v99 = vpack.c.b16 %v86, %v85
    %v100 = vpack.c.b16 %v88, %v87
    %v101 = vpack.c.b16 %v90, %v89
    %v102 = vpack.c.b16 %v92, %v91
    %v103 = vpack.c.b16 %v94, %v93
    %v104 = vpack.c.b16 %v96, %v95
    %113 = vmatpush.bf16.msra.mxu0 %v104
    %114 = vmatpush.bf16.msra.mxu0 %v103
    %115 = vmatpush.bf16.msra.mxu0 %v102
    %116 = vmatpush.bf16.msra.mxu0 %v101
    %117 = vmatpush.bf16.msra.mxu0 %v100
    %118 = vmatpush.bf16.msra.mxu0 %v99
    %119 = vmatpush.bf16.msra.mxu0 %v98
    %120 = vmatpush.bf16.msra.mxu0 %v97
    %121 = vmatmul.bf16.gmra.mxu0 %v63
    %v122 = vpop.f32.mrf.mxu0
    %v123 = vadd.f32 0.0, %v122
    %v124 = vpop.f32.mrf.mxu0
    %v125 = vadd.f32 0.0, %v124
    %126 = vdwg.mxu0
    %v127 = vld [vmem:[%s2] sm:$0xf]
    %v128 = vunpack.c.l.bf16 %v127
    %v129 = vadd.f32 %v123, %v128
    %v130 = vadd.f32 %v125, %v128
    %v131 = vpack.c.bf16 %v130, %v129
    %v132 = vld [vmem:[%s3] sm:$0xf]
    %v133 = vld [vmem:[%s3 + $0x4] sm:$0xf]
    %v134 = vld [vmem:[%s3 + $0x8] sm:$0xf]
    %v135 = vld [vmem:[%s3 + $0xc] sm:$0xf]
    %v140 = vunpack.c.l.b16 %v132
    %v141 = vunpack.c.l.b16 %v133
    %v142 = vunpack.c.l.b16 %v134
    %v143 = vunpack.c.l.b16 %v135
    %v144 = vpack.c.b16 %v141, %v140
    %v145 = vpack.c.b16 %v143, %v142
    %vm148 = vcmask 261120
    %v150 = vsel %vm148, %v131, 0
    %152 = vmatpush.bf16.msra.mxu0 0
    %153 = vmatpush.bf16.msra.mxu0 0
    %154 = vmatpush.bf16.msra.mxu0 0
    %155 = vmatpush.bf16.msra.mxu0 0
    %156 = vmatpush.bf16.msra.mxu0 0
    %157 = vmatpush.bf16.msra.mxu0 0
    %158 = vmatpush.bf16.msra.mxu0 %v145
    %159 = vmatpush.bf16.msra.mxu0 %v144
    %160 = vmatmul.bf16.gmra.mxu0 %v150
    %v161 = vpop.f32.mrf.mxu0
    %v162 = vadd.f32 0.0, %v161
    %v163 = vpop.f32.mrf.mxu0
    %v164 = vadd.f32 0.0, %v163
    %165 = vdwg.mxu0
    %s166 = scalar_lea.vmem %s3, 16
    %v167 = vld [vmem:[%s166] sm:$0xf]
    %v168 = vld [vmem:[%s166 + $0x4] sm:$0xf]
    %v169 = vld [vmem:[%s166 + $0x8] sm:$0xf]
    %v170 = vld [vmem:[%s166 + $0xc] sm:$0xf]
    %v175 = vunpack.c.l.b16 %v167
    %v176 = vunpack.c.l.b16 %v168
    %v177 = vunpack.c.l.b16 %v169
    %v178 = vunpack.c.l.b16 %v170
    %v179 = vpack.c.b16 %v176, %v175
    %v180 = vpack.c.b16 %v178, %v177
    %183 = vmatpush.bf16.msra.mxu0 0
    %184 = vmatpush.bf16.msra.mxu0 0
    %185 = vmatpush.bf16.msra.mxu0 0
    %186 = vmatpush.bf16.msra.mxu0 0
    %187 = vmatpush.bf16.msra.mxu0 0
    %188 = vmatpush.bf16.msra.mxu0 0
    %189 = vmatpush.bf16.msra.mxu0 %v180
    %190 = vmatpush.bf16.msra.mxu0 %v179
    %191 = vmatmul.bf16.gmra.mxu0 %v150
    %v192 = vpop.f32.mrf.mxu0
    %v193 = vadd.f32 0.0, %v192
    %v194 = vpop.f32.mrf.mxu0
    %v195 = vadd.f32 0.0, %v194
    %196 = vdwg.mxu0
    %s197 = scalar_lea.vmem %s3, 32
    %v198 = vld [vmem:[%s197] sm:$0xf]
    %v199 = vld [vmem:[%s197 + $0x4] sm:$0xf]
    %v200 = vld [vmem:[%s197 + $0x8] sm:$0xf]
    %v201 = vld [vmem:[%s197 + $0xc] sm:$0xf]
    %v206 = vunpack.c.l.b16 %v198
    %v207 = vunpack.c.l.b16 %v199
    %v208 = vunpack.c.l.b16 %v200
    %v209 = vunpack.c.l.b16 %v201
    %v210 = vpack.c.b16 %v207, %v206
    %v211 = vpack.c.b16 %v209, %v208
    %214 = vmatpush.bf16.msra.mxu0 0
    %215 = vmatpush.bf16.msra.mxu0 0
    %216 = vmatpush.bf16.msra.mxu0 0
    %217 = vmatpush.bf16.msra.mxu0 0
    %218 = vmatpush.bf16.msra.mxu0 0
    %219 = vmatpush.bf16.msra.mxu0 0
    %220 = vmatpush.bf16.msra.mxu0 %v211
    %221 = vmatpush.bf16.msra.mxu0 %v210
    %222 = vmatmul.bf16.gmra.mxu0 %v150
    %v223 = vpop.f32.mrf.mxu0
    %v224 = vadd.f32 0.0, %v223
    %v225 = vpop.f32.mrf.mxu0
    %v226 = vadd.f32 0.0, %v225
    %227 = vdwg.mxu0
    %v229 = vsel %vm148, %v162, 0
    %v232 = vsel %vm148, %v193, 0
    %234 = vmatpush.xpose.msra.mxu0 0.0
    %235 = vmatpush.xpose.msra.mxu0 0.0
    %236 = vmatpush.xpose.msra.mxu0 0.0
    %237 = vmatpush.xpose.msra.mxu0 0.0
    %238 = vmatpush.xpose.msra.mxu0 0.0
    %239 = vmatpush.xpose.msra.mxu0 0.0
    %240 = vmatpush.xpose.msra.mxu0 0.0
    %241 = vmatpush.xpose.msra.mxu0 0.0
    %242 = vmatpush.xpose.msra.mxu0 0.0
    %243 = vmatpush.xpose.msra.mxu0 0.0
    %244 = vmatpush.xpose.msra.mxu0 0.0
    %245 = vmatpush.xpose.msra.mxu0 0.0
    %246 = vmatpush.xpose.msra.mxu0 0.0
    %247 = vmatpush.xpose.msra.mxu0 0.0
    %248 = vmatpush.xpose.msra.mxu0 0.0
    %249 = vmatpush.xpose.msra.mxu0 %v232
    %250 = vmatmul.f32.gmra.mxu0 %v229
    %v251 = vpop.f32.mrf.mxu0
    %v252 = vadd.f32 0.0, %v251
    %253 = vdwg.mxu0
    %v255 = vsel %vm148, %v164, 0
    %v258 = vsel %vm148, %v195, 0
    %260 = vmatpush.xpose.msra.mxu0 0.0
    %261 = vmatpush.xpose.msra.mxu0 0.0
    %262 = vmatpush.xpose.msra.mxu0 0.0
    %263 = vmatpush.xpose.msra.mxu0 0.0
    %264 = vmatpush.xpose.msra.mxu0 0.0
    %265 = vmatpush.xpose.msra.mxu0 0.0
    %266 = vmatpush.xpose.msra.mxu0 0.0
    %267 = vmatpush.xpose.msra.mxu0 0.0
    %268 = vmatpush.xpose.msra.mxu0 0.0
    %269 = vmatpush.xpose.msra.mxu0 0.0
    %270 = vmatpush.xpose.msra.mxu0 0.0
    %271 = vmatpush.xpose.msra.mxu0 0.0
    %272 = vmatpush.xpose.msra.mxu0 0.0
    %273 = vmatpush.xpose.msra.mxu0 0.0
    %274 = vmatpush.xpose.msra.mxu0 0.0
    %275 = vmatpush.xpose.msra.mxu0 %v258
    %276 = vmatmul.f32.gmra.mxu0 %v255
    %v277 = vpop.f32.mrf.mxu0
    %v278 = vadd.f32 0.0, %v277
    %279 = vdwg.mxu0
    %v280 = vlaneseq
    %v281 = vshrl.u32 %v280, 7
    %vm282 = vcmp.le.s32.totalorder %v28, %v281
    %v283 = vsel %vm282, 1, 0
    %vm284 = vcmp.eq.s32.totalorder %v283, 1
    %v285 = vsel %vm284, %v252, -1e+30
    %v286 = vsel %vm284, %v278, -1e+30
    %vm287 = vcmask 64512
    %v288 = vsel %vm287, %v285, -inf
    %289 = vmax.xlane.f32.xlu0 %v288
    %v290 = vpop.xlane.xlu0 %289
    %v291 = vsel %vm287, %v286, -inf
    %292 = vmax.xlane.f32.xlu0 %v291
    %v293 = vpop.xlane.xlu0 %292
    %v294 = vsub.f32 %v285, %v290
    %v295 = vsub.f32 %v286, %v293
    %v296 = vmul.f32 %v294, 1.442695
    %v297 = vpow.pop %v296
    %v298 = vmul.f32 %v295, 1.442695
    %v299 = vpow.pop %v298
    %v300 = vsel %vm287, %v297, 0.0
    %301 = vadd.xlane.f32.xlu0 %v300
    %v302 = vpop.xlane.xlu0 %301
    %v303 = vsel %vm287, %v299, 0.0
    %304 = vadd.xlane.f32.xlu0 %v303
    %v305 = vpop.xlane.xlu0 %304
    %v306 = vrcp.pop %v302
    %v307 = vrcp.pop %v305
    %v308 = vmul.f32 %v297, %v306
    %v309 = vmul.f32 %v299, %v307
    %v311 = vsel %vm287, %v308, 0
    %313 = vmatpush.msra.mxu0 0.0
    %314 = vmatpush.msra.mxu0 0.0
    %315 = vmatpush.msra.mxu0 0.0
    %316 = vmatpush.msra.mxu0 0.0
    %317 = vmatpush.msra.mxu0 0.0
    %318 = vmatpush.msra.mxu0 0.0
    %319 = vmatpush.msra.mxu0 0.0
    %320 = vmatpush.msra.mxu0 0.0
    %321 = vmatpush.msra.mxu0 0.0
    %322 = vmatpush.msra.mxu0 0.0
    %323 = vmatpush.msra.mxu0 0.0
    %324 = vmatpush.msra.mxu0 0.0
    %325 = vmatpush.msra.mxu0 0.0
    %326 = vmatpush.msra.mxu0 0.0
    %327 = vmatpush.msra.mxu0 0.0
    %328 = vmatpush.msra.mxu0 %v224
    %329 = vmatmul.f32.gmra.mxu0 %v311
    %v330 = vpop.f32.mrf.mxu0
    %v331 = vadd.f32 0.0, %v330
    %332 = vdwg.mxu0
    %v334 = vsel %vm287, %v309, 0
    %336 = vmatpush.msra.mxu0 0.0
    %337 = vmatpush.msra.mxu0 0.0
    %338 = vmatpush.msra.mxu0 0.0
    %339 = vmatpush.msra.mxu0 0.0
    %340 = vmatpush.msra.mxu0 0.0
    %341 = vmatpush.msra.mxu0 0.0
    %342 = vmatpush.msra.mxu0 0.0
    %343 = vmatpush.msra.mxu0 0.0
    %344 = vmatpush.msra.mxu0 0.0
    %345 = vmatpush.msra.mxu0 0.0
    %346 = vmatpush.msra.mxu0 0.0
    %347 = vmatpush.msra.mxu0 0.0
    %348 = vmatpush.msra.mxu0 0.0
    %349 = vmatpush.msra.mxu0 0.0
    %350 = vmatpush.msra.mxu0 0.0
    %351 = vmatpush.msra.mxu0 %v226
    %352 = vmatmul.f32.gmra.mxu0 %v334
    %v353 = vpop.f32.mrf.mxu0
    %v354 = vadd.f32 0.0, %v353
    %355 = vdwg.mxu0
    %v356 = vpack.c.bf16 %v354, %v331
    %v357 = vld [vmem:[%s4] sm:$0xf]
    %v358 = vld [vmem:[%s4 + $0x4] sm:$0xf]
    %v359 = vld [vmem:[%s4 + $0x8] sm:$0xf]
    %v360 = vld [vmem:[%s4 + $0xc] sm:$0xf]
    %v361 = vld [vmem:[%s5] sm:$0x1]
    %v363 = vperm.slane %v361, 0
    %v369 = vunpack.c.l.b16 %v357
    %v370 = vunpack.c.l.b16 %v358
    %v371 = vunpack.c.l.b16 %v359
    %v372 = vunpack.c.l.b16 %v360
    %v373 = vpack.c.b16 %v370, %v369
    %v374 = vpack.c.b16 %v372, %v371
    %v378 = vsel %vm148, %v356, 0
    %380 = vmatpush.bf16.msra.mxu0 0
    %381 = vmatpush.bf16.msra.mxu0 0
    %382 = vmatpush.bf16.msra.mxu0 0
    %383 = vmatpush.bf16.msra.mxu0 0
    %384 = vmatpush.bf16.msra.mxu0 0
    %385 = vmatpush.bf16.msra.mxu0 0
    %386 = vmatpush.bf16.msra.mxu0 %v374
    %387 = vmatpush.bf16.msra.mxu0 %v373
    %388 = vmatmul.bf16.gmra.mxu0 %v378
    %v389 = vpop.f32.mrf.mxu0
    %v390 = vadd.f32 %v363, %v389
    %v391 = vpop.f32.mrf.mxu0
    %v392 = vadd.f32 %v363, %v391
    %393 = vdwg.mxu0
    %394 = vst [vmem:[#allocation2] sm:$0xff] %v390
    %395 = vst [vmem:[#allocation2 + $0x8] sm:$0xff] %v392
    // Predicated region
    $region26: #{tpu_custom_call.1} parent=1 // pred_check
      _
    $region27: #{tpu_custom_call.1} parent=1 // pred_check_branch
      %397 = sbr.rel (0) target = $region29
    $region28: #{tpu_custom_call.1} parent=1 // pred_region
      %399 = vsyncadd [#allocation3], 0
      %s400 = sshll.u32 [#allocation2], 4
      %s401 = int_to_ptr.vmem [resolvable:$true] %s400
      %s402 = sshll.u32 %s6, 4
      %s403 = int_to_ptr.hbm [resolvable:$true] %s402
      %408 = dma.vmem_to_hbm [thread:$0]  %s401, 256, %s403, [#allocation3], 128, 128, 8
    $region29: #{tpu_custom_call.1} parent=1 // pred_fallthru
      _
    // Predicated region
    $region30: #{tpu_custom_call.1} parent=1 // pred_check
      _
    $region31: #{tpu_custom_call.1} parent=1 // pred_check_branch
      %410 = sbr.rel (0) target = $region33
    $region32: #{tpu_custom_call.1} parent=1 // pred_region
      %412 = dma.done [#allocation3], 256
    $region33: #{tpu_custom_call.1} parent=1 // pred_fallthru
      _
    %413 = vsyncpa [#allocation3], 1

</llo_original>
